<compile_context>
chip_gen: v5e
topology: v5e:2x2
jax: 0.10.0
libtpu: 0.0.40
codegen_flags: <defaults>
</compile_context>

<pallas_src>
import functools

import jax
import jax.numpy as jnp
import numpy as np
from jax.experimental import pallas as pl
from jax.experimental.pallas import tpu as pltpu

_EPS = 1e-3        # CharbonnierLoss eps
_LANES = 128
_SUBLANES = 8


# ------------------------------- Pallas kernel -------------------------------

def _charbonnier_kernel(x_ref, y_ref, out_ref, *, rows_per_block, total_valid,
                        apply_mask):
    x = x_ref[...].astype(jnp.float32)          # (rows_per_block, 128)
    y = y_ref[...].astype(jnp.float32)
    d = x - y
    val = jnp.sqrt(d * d + _EPS * _EPS)

    if apply_mask:  # trace-time branch: only emitted when zero-padding exists
        i = pl.program_id(0)
        base = i * (rows_per_block * _LANES)
        ri = jax.lax.broadcasted_iota(jnp.int32, (rows_per_block, _LANES), 0)
        ci = jax.lax.broadcasted_iota(jnp.int32, (rows_per_block, _LANES), 1)
        flat = base + ri * _LANES + ci
        val = jnp.where(flat < total_valid, val, 0.0)

    # Fold sublane tiles: (rows_per_block, 128) -> (8, 128) partial sums.
    # Slices land on (8, 128) tile boundaries, so these are plain vreg adds.
    acc = val[0:_SUBLANES, :]
    for r in range(_SUBLANES, rows_per_block, _SUBLANES):
        acc = acc + val[r:r + _SUBLANES, :]
    out_ref[...] = acc


# --------------------------------- wrapper ------------------------------------

def charbonnier_loss(x, y, *, max_rows_per_block=512):
    """x, y: same-shape float arrays -> scalar Charbonnier loss."""
    assert x.shape == y.shape
    total = int(np.prod(x.shape))

    rows = (total + _LANES - 1) // _LANES
    rows = ((rows + _SUBLANES - 1) // _SUBLANES) * _SUBLANES   # multiple of 8
    rows_per_block = min(max_rows_per_block, rows)
    num_blocks = (rows + rows_per_block - 1) // rows_per_block
    rows_padded = num_blocks * rows_per_block
    pad = rows_padded * _LANES - total

    xf = jnp.pad(x.reshape(-1), (0, pad)).reshape(rows_padded, _LANES)
    yf = jnp.pad(y.reshape(-1), (0, pad)).reshape(rows_padded, _LANES)

    kernel = functools.partial(
        _charbonnier_kernel,
        rows_per_block=rows_per_block,
        total_valid=total,
        apply_mask=(pad > 0),
    )
    partials = pl.pallas_call(
        kernel,
        out_shape=jax.ShapeDtypeStruct((num_blocks * _SUBLANES, _LANES),
                                       jnp.float32),
        grid_spec=pltpu.PrefetchScalarGridSpec(
            num_scalar_prefetch=0,
            grid=(num_blocks,),
            in_specs=[
                pl.BlockSpec((rows_per_block, _LANES), lambda i: (i, 0)),
                pl.BlockSpec((rows_per_block, _LANES), lambda i: (i, 0)),
            ],
            out_specs=pl.BlockSpec((_SUBLANES, _LANES), lambda i: (i, 0)),
        ),
        compiler_params=pltpu.CompilerParams(
            dimension_semantics=("parallel",)),
    )(xf, yf)
    return jnp.sum(partials) / total


# --------------------------- pure-JAX reference check -------------------------

def charbonnier_loss_ref(x, y):
    d = x - y
    return jnp.mean(jnp.sqrt(d * d + _EPS * _EPS))


# ------------------------------------ main ------------------------------------

if __name__ == "__main__":
    key = jax.random.PRNGKey(0)
    kx, ky = jax.random.split(key)
    x = jax.random.normal(kx, (2, 4, 16, 16), dtype=jnp.float32)
    y = jax.random.normal(ky, (2, 4, 16, 16), dtype=jnp.float32)

    out = jax.block_until_ready(charbonnier_loss(x, y))
    ref = jax.block_until_ready(charbonnier_loss_ref(x, y))
    np.testing.assert_allclose(np.asarray(out), np.asarray(ref),
                               rtol=1e-5, atol=1e-6)
    print("KERNEL_OK")
</pallas_src>

<mosaic_0001>
module attributes {stable_mosaic.version = 11 : i64} {
  func.func @_charbonnier_kernel(%arg0: i32, %arg1: memref<16x128xf32, #tpu.memory_space<vmem>>, %arg2: memref<16x128xf32, #tpu.memory_space<vmem>>, %arg3: memref<8x128xf32, #tpu.memory_space<vmem>>) attributes {dimension_semantics = [#tpu.dimension_semantics<parallel>], iteration_bounds = array<i64: 1>, scalar_prefetch = 0 : i64, scratch_operands = 0 : i64, tpu.core_type = #tpu.core_type<tc>, window_params = [{transform_indices = @transform_0, window_bounds = array<i64: 16, 128>}, {transform_indices = @transform_1, window_bounds = array<i64: 16, 128>}, {transform_indices = @transform_2, window_bounds = array<i64: 8, 128>}]} {
    %c0 = arith.constant 0 : index
    %c0_0 = arith.constant 0 : index
    %0 = vector.load %arg1[%c0, %c0_0] : memref<16x128xf32, #tpu.memory_space<vmem>>, vector<16x128xf32>
    %c0_1 = arith.constant 0 : index
    %c0_2 = arith.constant 0 : index
    %1 = vector.load %arg2[%c0_1, %c0_2] : memref<16x128xf32, #tpu.memory_space<vmem>>, vector<16x128xf32>
    %2 = arith.subf %0, %1 : vector<16x128xf32>
    %3 = arith.mulf %2, %2 : vector<16x128xf32>
    %cst = arith.constant 9.99999997E-7 : f32
    %4 = vector.broadcast %cst : f32 to vector<16x128xf32>
    %5 = arith.addf %3, %4 : vector<16x128xf32>
    %6 = math.sqrt %5 : vector<16x128xf32>
    %7 = vector.extract_strided_slice %6 {offsets = [0, 0], sizes = [8, 128], strides = [1, 1]} : vector<16x128xf32> to vector<8x128xf32>
    %8 = vector.extract_strided_slice %6 {offsets = [8, 0], sizes = [8, 128], strides = [1, 1]} : vector<16x128xf32> to vector<8x128xf32>
    %9 = arith.addf %7, %8 : vector<8x128xf32>
    %c0_3 = arith.constant 0 : index
    %c0_4 = arith.constant 0 : index
    %10 = vector.load %arg3[%c0_3, %c0_4] : memref<8x128xf32, #tpu.memory_space<vmem>>, vector<8x128xf32>
    tpu.vector_store %arg3[%c0_3, %c0_4], %9 {strides = array<i32>} : memref<8x128xf32, #tpu.memory_space<vmem>>, vector<8x128xf32>,
    return
  }
  func.func @transform_0(%arg0: i32) -> (i32, i32) {
    %c0_i32 = arith.constant 0 : i32
    %c0_i32_0 = arith.constant 0 : i32
    return %arg0, %c0_i32 : i32, i32
  }
  func.func @transform_1(%arg0: i32) -> (i32, i32) {
    %c0_i32 = arith.constant 0 : i32
    %c0_i32_0 = arith.constant 0 : i32
    return %arg0, %c0_i32 : i32, i32
  }
  func.func @transform_2(%arg0: i32) -> (i32, i32) {
    %c0_i32 = arith.constant 0 : i32
    %c0_i32_0 = arith.constant 0 : i32
    return %arg0, %c0_i32 : i32, i32
  }
}

</mosaic_0001>

<llo_original>
// kernel: tpu_custom_call.1
$region0: #{tpu_custom_call.1}
  #allocation0 [shape = 'u32[]', space=smem, size = 0x4, offset = 0x4, fixed_abs, tag = 'smem constant byte address 0x4 - core index']
  #allocation1 [shape = 'u32[72,128]{1,0:T(1,128)}', space=vmem, size = 0x9000, scoped, tag = 'internal scratch']
  %s0 = inlined_call_operand.hbm [shape: f32[16,128], index: 0, kind: input, shape index: {}]
  %s1 = inlined_call_operand.hbm [shape: f32[16,128], index: 1, kind: input, shape index: {}]
  %s2 = inlined_call_operand.hbm [shape: f32[8,128], index: 2, kind: output, shape index: {}]
  %s3 = sld [smem:[#allocation0]]
  $region26: #{tpu_custom_call.1} parent=0
    _
  %s5 = ssub.s32 1, %s3
  %s6 = scalar_select 0, %s5, %s3
  $region1: #{tpu_custom_call.1} parent=0
    #allocation2 [shape = 'u8[8192]{0}', space=vmem, size = 0x2000, scoped, tag = 'input window, operand 0, single buffered']
    #allocation3 [shape = 's32[1]{0}', space=sflag, size = 0x4, scoped, tag = 'scoped memory for tpu_custom_call.1']
    #allocation4 [shape = 's32[1]{0}', space=sflag, size = 0x4, scoped, tag = 'scoped memory for tpu_custom_call.1']
    #allocation5 [shape = 'u8[8192]{0}', space=vmem, size = 0x2000, scoped, tag = 'input window, operand 1, single buffered']
    #allocation6 [shape = 's32[1]{0}', space=sflag, size = 0x4, scoped, tag = 'scoped memory for tpu_custom_call.1']
    #allocation7 [shape = 'u8[4096]{0}', space=vmem, size = 0x1000, scoped, tag = 'output window, operand 0, single buffered']
    %7 = vsyncpa [#allocation3], 0
    %8 = vsyncpa [#allocation6], 0
    %9 = vsyncpa [#allocation4], 0
    // Predicated region
    $region2: #{tpu_custom_call.1} parent=1 // pred_check
      _
    $region3: #{tpu_custom_call.1} parent=1 // pred_check_branch
      %11 = sbr.rel (0) target = $region5
    $region4: #{tpu_custom_call.1} parent=1 // pred_region
      %13 = vsyncadd [#allocation3], 0
      %s14 = sshll.u32 %s0, 4
      %s15 = int_to_ptr.hbm [resolvable:$true] %s14
      %s16 = sshll.u32 [#allocation2], 4
      %s17 = int_to_ptr.vmem [resolvable:$true] %s16
      %22 = dma.hbm_to_vmem [thread:$0]  %s15, 256, %s17, [#allocation3], 128, 128, 8
    $region5: #{tpu_custom_call.1} parent=1 // pred_fallthru
      _
    // Predicated region
    $region6: #{tpu_custom_call.1} parent=1 // pred_check
      _
    $region7: #{tpu_custom_call.1} parent=1 // pred_check_branch
      %24 = sbr.rel (0) target = $region9
    $region8: #{tpu_custom_call.1} parent=1 // pred_region
      %26 = vsyncadd [#allocation6], 0
      %s27 = sshll.u32 %s1, 4
      %s28 = int_to_ptr.hbm [resolvable:$true] %s27
      %s29 = sshll.u32 [#allocation5], 4
      %s30 = int_to_ptr.vmem [resolvable:$true] %s29
      %35 = dma.hbm_to_vmem [thread:$0]  %s28, 256, %s30, [#allocation6], 128, 128, 8
    $region9: #{tpu_custom_call.1} parent=1 // pred_fallthru
      _
    // Predicated region
    $region10: #{tpu_custom_call.1} parent=1 // pred_check
      _
    $region11: #{tpu_custom_call.1} parent=1 // pred_check_branch
      %37 = sbr.rel (0) target = $region13
    $region12: #{tpu_custom_call.1} parent=1 // pred_region
      %39 = dma.done [#allocation3], 256
    $region13: #{tpu_custom_call.1} parent=1 // pred_fallthru
      _
    // Predicated region
    $region14: #{tpu_custom_call.1} parent=1 // pred_check
      _
    $region15: #{tpu_custom_call.1} parent=1 // pred_check_branch
      %41 = sbr.rel (0) target = $region17
    $region16: #{tpu_custom_call.1} parent=1 // pred_region
      %43 = dma.done [#allocation6], 256
    $region17: #{tpu_custom_call.1} parent=1 // pred_fallthru
      _
    %v44 = vld [vmem:[#allocation2] sm:$0xff]
    %v45 = vld [vmem:[#allocation2 + $0x8] sm:$0xff]
    %v46 = vld [vmem:[#allocation5] sm:$0xff]
    %v47 = vld [vmem:[#allocation5 + $0x8] sm:$0xff]
    %v48 = vsub.f32 %v44, %v46
    %v49 = vsub.f32 %v45, %v47
    %v50 = vmul.f32 %v48, %v48
    %v51 = vmul.f32 %v49, %v49
    %v52 = vadd.f32 %v50, 1e-06
    %v53 = vadd.f32 %v51, 1e-06
    %v54 = vrsqrt.pop %v52
    %v55 = vmul.f32 %v54, %v52
    %v56 = vmul.f32 %v55, %v54
    %v57 = vmul.f32 0.5, %v56
    %v58 = vsub.f32 1.5, %v57
    %v59 = vmul.f32 %v54, %v58
    %v60 = vmul.f32 %v52, %v59
    %vm61 = vcmp.eq.f32.partialorder %v52, inf
    %v62 = vsel %vm61, %v52, %v60
    %vm63 = vcmp.eq.f32.partialorder %v52, 0.0
    %v64 = vand.u32 %v52, 2147483648
    %v65 = vsel %vm63, %v64, %v62
    %v66 = vrsqrt.pop %v53
    %v67 = vmul.f32 %v66, %v53
    %v68 = vmul.f32 %v67, %v66
    %v69 = vmul.f32 0.5, %v68
    %v70 = vsub.f32 1.5, %v69
    %v71 = vmul.f32 %v66, %v70
    %v72 = vmul.f32 %v53, %v71
    %vm73 = vcmp.eq.f32.partialorder %v53, inf
    %v74 = vsel %vm73, %v53, %v72
    %vm75 = vcmp.eq.f32.partialorder %v53, 0.0
    %v76 = vand.u32 %v53, 2147483648
    %v77 = vsel %vm75, %v76, %v74
    %v78 = vadd.f32 %v65, %v77
    %79 = vst [vmem:[#allocation7] sm:$0xff] %v78
    // Predicated region
    $region18: #{tpu_custom_call.1} parent=1 // pred_check
      _
    $region19: #{tpu_custom_call.1} parent=1 // pred_check_branch
      %81 = sbr.rel (0) target = $region21
    $region20: #{tpu_custom_call.1} parent=1 // pred_region
      %83 = vsyncadd [#allocation4], 0
      %s85 = sshll.u32 [#allocation7], 4
      %s86 = int_to_ptr.vmem [resolvable:$true] %s85
      %s87 = sshll.u32 %s2, 4
      %s88 = int_to_ptr.hbm [resolvable:$true] %s87
      %90 = dma.vmem_to_hbm [thread:$0]  %s86, 128, %s88, [#allocation4]
    $region21: #{tpu_custom_call.1} parent=1 // pred_fallthru
      _
    // Predicated region
    $region22: #{tpu_custom_call.1} parent=1 // pred_check
      _
    $region23: #{tpu_custom_call.1} parent=1 // pred_check_branch
      %92 = sbr.rel (0) target = $region25
    $region24: #{tpu_custom_call.1} parent=1 // pred_region
      %94 = dma.done [#allocation4], 128
    $region25: #{tpu_custom_call.1} parent=1 // pred_fallthru
      _
    %95 = vsyncpa [#allocation3], 1
    %96 = vsyncpa [#allocation6], 1
    %97 = vsyncpa [#allocation4], 1

</llo_original>
